<compile_context>
chip_gen: v6e
topology: v6e:2x2x1
jax: 0.10.0
libtpu: 0.0.40
codegen_flags: <defaults>
</compile_context>

<pallas_src>
import functools

import jax
import jax.numpy as jnp
from jax.experimental import pallas as pl
from jax.experimental.pallas import tpu as pltpu

MAX_ACTION = 1.0  # externally-set attribute in the PyTorch module


def _round_up(x, m):
    return ((x + m - 1) // m) * m


# -----------------------------------------------------------------------------
# Kernel: entire 3-layer MLP fused, one batch tile per grid step.
# -----------------------------------------------------------------------------
def _dqn_kernel(x_ref, w1_ref, b1_ref, w2_ref, b2_ref, w3_ref, b3_ref, o_ref,
                *, max_action):
    w_dtype = w1_ref.dtype                       # matmul operand dtype (bf16/f32)
    x = x_ref[...].astype(w_dtype)

    h1 = jnp.dot(x, w1_ref[...], preferred_element_type=jnp.float32)
    h1 = jnp.maximum(h1 + b1_ref[...], 0.0)                       # relu(fc1), f32

    h2 = jnp.dot(h1.astype(w_dtype), w2_ref[...],
                 preferred_element_type=jnp.float32)
    h2 = jnp.maximum(h2 + b2_ref[...], 0.0)                       # relu(fc2), f32

    q = jnp.dot(h2.astype(w_dtype), w3_ref[...],
                preferred_element_type=jnp.float32)
    q = q + b3_ref[...]                                           # fc3, f32

    o_ref[...] = (max_action * jnp.tanh(q)).astype(o_ref.dtype)   # max_action*tanh


# -----------------------------------------------------------------------------
# One-time parameter prep (run OUTSIDE the RL inference/training loop):
# zero-pads hidden dims to 128 lanes and casts weight operands to compute_dtype.
# Padded W columns / bias lanes are exactly 0, so padded lanes stay 0 through
# ReLU and padded W rows of the next layer contribute nothing -> numerics
# identical to the unpadded network (up to compute_dtype rounding).
# -----------------------------------------------------------------------------
def prepare_dqn_params(w1, b1, w2, b2, w3, b3, compute_dtype=jnp.bfloat16):
    """w*: (in, out) f32, b*: (1, out) f32. Returns dict of padded params."""
    D_in, H1 = w1.shape
    H2 = w2.shape[1]
    A = w3.shape[1]
    H1p = _round_up(H1, 128)
    H2p = _round_up(H2, 128)

    w1p = jnp.zeros((D_in, H1p), jnp.float32).at[:, :H1].set(w1)
    b1p = jnp.zeros((1, H1p), jnp.float32).at[:, :H1].set(b1)
    w2p = jnp.zeros((H1p, H2p), jnp.float32).at[:H1, :H2].set(w2)
    b2p = jnp.zeros((1, H2p), jnp.float32).at[:, :H2].set(b2)
    w3p = jnp.zeros((H2p, A), jnp.float32).at[:H2, :].set(w3)
    b3p = jnp.asarray(b3, jnp.float32).reshape(1, A)

    return dict(
        w1=w1p.astype(compute_dtype), b1=b1p,
        w2=w2p.astype(compute_dtype), b2=b2p,
        w3=w3p.astype(compute_dtype), b3=b3p,
    )


# -----------------------------------------------------------------------------
# Hot-path forward: batch tiling only, pre-padded/pre-cast params passed in.
# -----------------------------------------------------------------------------
def dqn_forward(state, params, *, max_action=MAX_ACTION, batch_tile=512):
    """state: (B, D_in) f32. params from prepare_dqn_params. Returns (B, A) f32."""
    B, D_in = state.shape
    w1, b1 = params["w1"], params["b1"]
    w2, b2 = params["w2"], params["b2"]
    w3, b3 = params["w3"], params["b3"]
    H1p, H2p, A = w1.shape[1], w2.shape[1], w3.shape[1]
    assert w1.shape[0] == D_in, (w1.shape, D_in)

    # --- Batch tiling.
    if B < 8:
        # Latency path (single-state action selection): full-extent batch block
        # (allowed by the (8,128) rule), grid=(1,), no pad-in / slice-out.
        TB, Bp = B, B
        state_p = state
    else:
        Bp8 = _round_up(B, 8)
        TB = min(batch_tile, Bp8)
        # v7x: keep >= 2 grid steps so the parallel batch axis can be split
        # across the 2 TensorCores; neutral on v5e/v6e (1 TC).
        if TB == Bp8 and Bp8 >= 16:
            TB = _round_up(pl.cdiv(Bp8, 2), 8)
        Bp = _round_up(B, TB)
        state_p = state if Bp == B else (
            jnp.zeros((Bp, D_in), state.dtype).at[:B, :].set(state))
    grid = (Bp // TB,)

    kernel = functools.partial(_dqn_kernel, max_action=max_action)

    wbytes = jnp.dtype(w1.dtype).itemsize
    cost = pl.CostEstimate(
        flops=2 * Bp * (D_in * H1p + H1p * H2p + H2p * A),
        transcendentals=Bp * A,
        bytes_accessed=(Bp * D_in * 4 + Bp * A * 4
                        + (D_in * H1p + H1p * H2p + H2p * A) * wbytes
                        + (H1p + H2p + A) * 4),
    )

    out_p = pl.pallas_call(
        kernel,
        out_shape=jax.ShapeDtypeStruct((Bp, A), jnp.float32),
        grid_spec=pl.GridSpec(
            grid=grid,
            in_specs=[
                pl.BlockSpec((TB, D_in), lambda i: (i, 0)),    # state tile
                pl.BlockSpec((D_in, H1p), lambda i: (0, 0)),   # W1 (grid-invariant)
                pl.BlockSpec((1, H1p), lambda i: (0, 0)),      # b1
                pl.BlockSpec((H1p, H2p), lambda i: (0, 0)),    # W2
                pl.BlockSpec((1, H2p), lambda i: (0, 0)),      # b2
                pl.BlockSpec((H2p, A), lambda i: (0, 0)),      # W3
                pl.BlockSpec((1, A), lambda i: (0, 0)),        # b3
            ],
            out_specs=pl.BlockSpec((TB, A), lambda i: (i, 0)),
        ),
        compiler_params=pltpu.CompilerParams(
            dimension_semantics=("parallel",)),                # batch tiles independent
        cost_estimate=cost,
    )(state_p, w1, b1, w2, b2, w3, b3)

    return out_p if Bp == B else out_p[:B]


# -----------------------------------------------------------------------------
# Reference + init helpers
# -----------------------------------------------------------------------------
def init_linear(key, fan_in, fan_out):
    # Mimics nn.Linear default: U(-1/sqrt(fan_in), +1/sqrt(fan_in)).
    kw, kb = jax.random.split(key)
    bound = 1.0 / jnp.sqrt(jnp.float32(fan_in))
    w = jax.random.uniform(kw, (fan_in, fan_out), jnp.float32, -bound, bound)
    b = jax.random.uniform(kb, (1, fan_out), jnp.float32, -bound, bound)
    return w, b


def reference_forward(state, w1, b1, w2, b2, w3, b3, max_action=MAX_ACTION):
    h1 = jax.nn.relu(state @ w1 + b1)
    h2 = jax.nn.relu(h1 @ w2 + b2)
    return max_action * jnp.tanh(h2 @ w3 + b3)


if __name__ == "__main__":
    # DQN dims: input_dims=(8,), fc1_dims=32, fc2_dims=32, n_actions=4, batch=2
    B, D_IN, FC1, FC2, N_ACT = 2, 8, 32, 32, 4

    key = jax.random.PRNGKey(0)
    k_state, k_big, k1, k2, k3 = jax.random.split(key, 5)

    state = jax.random.normal(k_state, (B, D_IN), jnp.float32)
    w1, b1 = init_linear(k1, D_IN, FC1)
    w2, b2 = init_linear(k2, FC1, FC2)
    w3, b3 = init_linear(k3, FC2, N_ACT)

    ref = reference_forward(state, w1, b1, w2, b2, w3, b3)

    fwd = jax.jit(dqn_forward, static_argnames=("max_action", "batch_tile"))

    # --- bf16 weight operands (default, MXU-native on v5e/v6e/v7x), f32 accum.
    params_bf16 = prepare_dqn_params(w1, b1, w2, b2, w3, b3,
                                     compute_dtype=jnp.bfloat16)
    out_bf16 = jax.block_until_ready(fwd(state, params_bf16))
    assert out_bf16.shape == (B, N_ACT), out_bf16.shape
    assert jnp.allclose(out_bf16, ref, atol=5e-2, rtol=5e-2), (out_bf16, ref)

    # --- f32 weight operands: bit-accurate path.
    params_f32 = prepare_dqn_params(w1, b1, w2, b2, w3, b3,
                                    compute_dtype=jnp.float32)
    out_f32 = jax.block_until_ready(fwd(state, params_f32))
    assert out_f32.shape == (B, N_ACT), out_f32.shape
    assert jnp.allclose(out_f32, ref, atol=1e-5, rtol=1e-5), (out_f32, ref)

    # --- Larger batch: exercises the tiled path (>= 2 grid steps for v7x).
    B_BIG = 32
    state_big = jax.random.normal(k_big, (B_BIG, D_IN), jnp.float32)
    ref_big = reference_forward(state_big, w1, b1, w2, b2, w3, b3)
    out_big = jax.block_until_ready(fwd(state_big, params_f32))
    assert out_big.shape == (B_BIG, N_ACT), out_big.shape
    assert jnp.allclose(out_big, ref_big, atol=1e-5, rtol=1e-5)

    print("KERNEL_OK")
</pallas_src>

<mosaic_0001>
module attributes {stable_mosaic.version = 11 : i64} {
  func.func @_dqn_kernel(%arg0: i32, %arg1: memref<2x8xf32, #tpu.memory_space<vmem>>, %arg2: memref<8x128xbf16, #tpu.memory_space<vmem>>, %arg3: memref<1x128xf32, #tpu.memory_space<vmem>>, %arg4: memref<128x128xbf16, #tpu.memory_space<vmem>>, %arg5: memref<1x128xf32, #tpu.memory_space<vmem>>, %arg6: memref<128x4xbf16, #tpu.memory_space<vmem>>, %arg7: memref<1x4xf32, #tpu.memory_space<vmem>>, %arg8: memref<2x4xf32, #tpu.memory_space<vmem>>) attributes {dimension_semantics = [#tpu.dimension_semantics<parallel>], iteration_bounds = array<i64: 1>, scalar_prefetch = 0 : i64, scratch_operands = 0 : i64, tpu.core_type = #tpu.core_type<tc>, window_params = [{transform_indices = @transform_0, window_bounds = array<i64: 2, 8>}, {pipeline_mode = #tpu.pipeline_mode<synchronous>, transform_indices = @transform_1, window_bounds = array<i64: 8, 128>}, {pipeline_mode = #tpu.pipeline_mode<synchronous>, transform_indices = @transform_2, window_bounds = array<i64: 1, 128>}, {pipeline_mode = #tpu.pipeline_mode<synchronous>, transform_indices = @transform_3, window_bounds = array<i64: 128, 128>}, {pipeline_mode = #tpu.pipeline_mode<synchronous>, transform_indices = @transform_4, window_bounds = array<i64: 1, 128>}, {pipeline_mode = #tpu.pipeline_mode<synchronous>, transform_indices = @transform_5, window_bounds = array<i64: 128, 4>}, {pipeline_mode = #tpu.pipeline_mode<synchronous>, transform_indices = @transform_6, window_bounds = array<i64: 1, 4>}, {transform_indices = @transform_7, window_bounds = array<i64: 2, 4>}]} {
    %c0 = arith.constant 0 : index
    %c0_0 = arith.constant 0 : index
    %0 = vector.load %arg1[%c0, %c0_0] : memref<2x8xf32, #tpu.memory_space<vmem>>, vector<2x8xf32>
    %1 = arith.truncf %0 : vector<2x8xf32> to vector<2x8xbf16>
    %c0_1 = arith.constant 0 : index
    %c0_2 = arith.constant 0 : index
    %2 = vector.load %arg2[%c0_1, %c0_2] : memref<8x128xbf16, #tpu.memory_space<vmem>>, vector<8x128xbf16>
    %cst = arith.constant dense<0.000000e+00> : vector<2x128xf32>
    %3 = tpu.matmul %1, %2, %cst {dimension_numbers = #tpu.dot_dimension_numbers<[1], [0], [0], [1], [0, 0, 1, 1], [], []>} : vector<2x8xbf16>, vector<8x128xbf16>, vector<2x128xf32> -> vector<2x128xf32>
    %c0_3 = arith.constant 0 : index
    %c0_4 = arith.constant 0 : index
    %4 = vector.load %arg3[%c0_3, %c0_4] : memref<1x128xf32, #tpu.memory_space<vmem>>, vector<1x128xf32>
    %5 = vector.broadcast %4 : vector<1x128xf32> to vector<2x128xf32>
    %6 = arith.addf %3, %5 : vector<2x128xf32>
    %cst_5 = arith.constant 0.000000e+00 : f32
    %7 = vector.broadcast %cst_5 : f32 to vector<2x128xf32>
    %8 = arith.maximumf %6, %7 : vector<2x128xf32>
    %9 = arith.truncf %8 : vector<2x128xf32> to vector<2x128xbf16>
    %c0_6 = arith.constant 0 : index
    %c0_7 = arith.constant 0 : index
    %10 = vector.load %arg4[%c0_6, %c0_7] : memref<128x128xbf16, #tpu.memory_space<vmem>>, vector<128x128xbf16>
    %cst_8 = arith.constant dense<0.000000e+00> : vector<2x128xf32>
    %11 = tpu.matmul %9, %10, %cst_8 {dimension_numbers = #tpu.dot_dimension_numbers<[1], [0], [0], [1], [0, 0, 1, 1], [], []>} : vector<2x128xbf16>, vector<128x128xbf16>, vector<2x128xf32> -> vector<2x128xf32>
    %c0_9 = arith.constant 0 : index
    %c0_10 = arith.constant 0 : index
    %12 = vector.load %arg5[%c0_9, %c0_10] : memref<1x128xf32, #tpu.memory_space<vmem>>, vector<1x128xf32>
    %13 = vector.broadcast %12 : vector<1x128xf32> to vector<2x128xf32>
    %14 = arith.addf %11, %13 : vector<2x128xf32>
    %cst_11 = arith.constant 0.000000e+00 : f32
    %15 = vector.broadcast %cst_11 : f32 to vector<2x128xf32>
    %16 = arith.maximumf %14, %15 : vector<2x128xf32>
    %17 = arith.truncf %16 : vector<2x128xf32> to vector<2x128xbf16>
    %c0_12 = arith.constant 0 : index
    %c0_13 = arith.constant 0 : index
    %18 = vector.load %arg6[%c0_12, %c0_13] : memref<128x4xbf16, #tpu.memory_space<vmem>>, vector<128x4xbf16>
    %cst_14 = arith.constant dense<0.000000e+00> : vector<2x4xf32>
    %19 = tpu.matmul %17, %18, %cst_14 {dimension_numbers = #tpu.dot_dimension_numbers<[1], [0], [0], [1], [0, 0, 1, 1], [], []>} : vector<2x128xbf16>, vector<128x4xbf16>, vector<2x4xf32> -> vector<2x4xf32>
    %c0_15 = arith.constant 0 : index
    %c0_16 = arith.constant 0 : index
    %20 = vector.load %arg7[%c0_15, %c0_16] : memref<1x4xf32, #tpu.memory_space<vmem>>, vector<1x4xf32>
    %21 = vector.broadcast %20 : vector<1x4xf32> to vector<2x4xf32>
    %22 = arith.addf %19, %21 : vector<2x4xf32>
    %23 = math.tanh %22 : vector<2x4xf32>
    %cst_17 = arith.constant 1.000000e+00 : f32
    %24 = vector.broadcast %cst_17 : f32 to vector<2x4xf32>
    %25 = arith.mulf %24, %23 : vector<2x4xf32>
    %c0_18 = arith.constant 0 : index
    %c0_19 = arith.constant 0 : index
    %26 = vector.load %arg8[%c0_18, %c0_19] : memref<2x4xf32, #tpu.memory_space<vmem>>, vector<2x4xf32>
    tpu.vector_store %arg8[%c0_18, %c0_19], %25 {strides = array<i32>} : memref<2x4xf32, #tpu.memory_space<vmem>>, vector<2x4xf32>,
    return
  }
  func.func @transform_0(%arg0: i32) -> (i32, i32) {
    %c0_i32 = arith.constant 0 : i32
    %c0_i32_0 = arith.constant 0 : i32
    return %arg0, %c0_i32 : i32, i32
  }
  func.func @transform_1(%arg0: i32) -> (i32, i32) {
    %c0_i32 = arith.constant 0 : i32
    %c0_i32_0 = arith.constant 0 : i32
    %c0_i32_1 = arith.constant 0 : i32
    return %c0_i32, %c0_i32_0 : i32, i32
  }
  func.func @transform_2(%arg0: i32) -> (i32, i32) {
    %c0_i32 = arith.constant 0 : i32
    %c0_i32_0 = arith.constant 0 : i32
    %c0_i32_1 = arith.constant 0 : i32
    return %c0_i32, %c0_i32_0 : i32, i32
  }
  func.func @transform_3(%arg0: i32) -> (i32, i32) {
    %c0_i32 = arith.constant 0 : i32
    %c0_i32_0 = arith.constant 0 : i32
    %c0_i32_1 = arith.constant 0 : i32
    return %c0_i32, %c0_i32_0 : i32, i32
  }
  func.func @transform_4(%arg0: i32) -> (i32, i32) {
    %c0_i32 = arith.constant 0 : i32
    %c0_i32_0 = arith.constant 0 : i32
    %c0_i32_1 = arith.constant 0 : i32
    return %c0_i32, %c0_i32_0 : i32, i32
  }
  func.func @transform_5(%arg0: i32) -> (i32, i32) {
    %c0_i32 = arith.constant 0 : i32
    %c0_i32_0 = arith.constant 0 : i32
    %c0_i32_1 = arith.constant 0 : i32
    return %c0_i32, %c0_i32_0 : i32, i32
  }
  func.func @transform_6(%arg0: i32) -> (i32, i32) {
    %c0_i32 = arith.constant 0 : i32
    %c0_i32_0 = arith.constant 0 : i32
    %c0_i32_1 = arith.constant 0 : i32
    return %c0_i32, %c0_i32_0 : i32, i32
  }
  func.func @transform_7(%arg0: i32) -> (i32, i32) {
    %c0_i32 = arith.constant 0 : i32
    %c0_i32_0 = arith.constant 0 : i32
    return %arg0, %c0_i32 : i32, i32
  }
}

</mosaic_0001>

<llo_original>
// kernel: dqn_forward.1
$region0: #{dqn_forward.1}
  #allocation0 [shape = 'u32[]', space=smem, size = 0x4, offset = 0x4, fixed_abs, tag = 'smem constant byte address 0x4 - core index']
  #allocation1 [shape = 'u32[144,128]{1,0:T(1,128)}', space=vmem, size = 0x12000, scoped, tag = 'internal scratch']
  %s0 = inlined_call_operand.vmem [shape: f32[2,8], index: 0, kind: input, shape index: {}]
  %s1 = inlined_call_operand.vmem [shape: bf16[8,128], index: 1, kind: input, shape index: {}]
  %s2 = inlined_call_operand.vmem [shape: f32[1,128], index: 2, kind: input, shape index: {}]
  %s3 = inlined_call_operand.vmem [shape: bf16[128,128], index: 3, kind: input, shape index: {}]
  %s4 = inlined_call_operand.vmem [shape: f32[1,128], index: 4, kind: input, shape index: {}]
  %s5 = inlined_call_operand.vmem [shape: bf16[128,4], index: 5, kind: input, shape index: {}]
  %s6 = inlined_call_operand.vmem [shape: f32[1,4], index: 6, kind: input, shape index: {}]
  %s7 = inlined_call_operand.hbm [shape: f32[2,4], index: 7, kind: output, shape index: {}]
  %s8 = sld [smem:[#allocation0]]
  $region38: #{dqn_forward.1} parent=0
    _
  %s10 = ssub.s32 1, %s8
  %s11 = scalar_select 0, %s10, %s8
  $region1: #{dqn_forward.1} parent=0
    #allocation2 [shape = 'u8[1024]{0}', space=vmem, size = 0x400, scoped, tag = 'output window, operand 0, single buffered']
    #allocation3 [shape = 's32[1]{0}', space=sflag, size = 0x4, scoped, tag = 'scoped memory for dqn_forward.1']
    %12 = vsyncpa [#allocation3], 0
    // Predicated region
    $region2: #{dqn_forward.1} parent=1 // pred_check
      _
    $region3: #{dqn_forward.1} parent=1 // pred_check_branch
      %14 = sbr.rel (0) target = $region5
    $region4: #{dqn_forward.1} parent=1 // pred_region
      _
    $region5: #{dqn_forward.1} parent=1 // pred_fallthru
      _
    // Predicated region
    $region6: #{dqn_forward.1} parent=1 // pred_check
      _
    $region7: #{dqn_forward.1} parent=1 // pred_check_branch
      %16 = sbr.rel (0) target = $region9
    $region8: #{dqn_forward.1} parent=1 // pred_region
      _
    $region9: #{dqn_forward.1} parent=1 // pred_fallthru
      _
    // Predicated region
    $region10: #{dqn_forward.1} parent=1 // pred_check
      _
    $region11: #{dqn_forward.1} parent=1 // pred_check_branch
      %18 = sbr.rel (0) target = $region13
    $region12: #{dqn_forward.1} parent=1 // pred_region
      _
    $region13: #{dqn_forward.1} parent=1 // pred_fallthru
      _
    // Predicated region
    $region14: #{dqn_forward.1} parent=1 // pred_check
      _
    $region15: #{dqn_forward.1} parent=1 // pred_check_branch
      %20 = sbr.rel (0) target = $region17
    $region16: #{dqn_forward.1} parent=1 // pred_region
      _
    $region17: #{dqn_forward.1} parent=1 // pred_fallthru
      _
    // Predicated region
    $region18: #{dqn_forward.1} parent=1 // pred_check
      _
    $region19: #{dqn_forward.1} parent=1 // pred_check_branch
      %22 = sbr.rel (0) target = $region21
    $region20: #{dqn_forward.1} parent=1 // pred_region
      _
    $region21: #{dqn_forward.1} parent=1 // pred_fallthru
      _
    // Predicated region
    $region22: #{dqn_forward.1} parent=1 // pred_check
      _
    $region23: #{dqn_forward.1} parent=1 // pred_check_branch
      %24 = sbr.rel (0) target = $region25
    $region24: #{dqn_forward.1} parent=1 // pred_region
      _
    $region25: #{dqn_forward.1} parent=1 // pred_fallthru
      _
    // Predicated region
    $region26: #{dqn_forward.1} parent=1 // pred_check
      _
    $region27: #{dqn_forward.1} parent=1 // pred_check_branch
      %26 = sbr.rel (0) target = $region29
    $region28: #{dqn_forward.1} parent=1 // pred_region
      _
    $region29: #{dqn_forward.1} parent=1 // pred_fallthru
      _
    %v28 = vld [vmem:[%s0] sm:$0x3]
    %v29 = vpack.c.bf16 %v28, %v28
    %v30 = vld [vmem:[%s1] sm:$0xf]
    %v31 = vld [vmem:[%s2] sm:$0x1]
    %v33 = vlaneseq
    %v34 = vshrl.u32 %v33, 7
    %v35 = vsub.s32 0, %v34
    %v36 = vrot.slane %v31, %v35
    %vm38 = vcmask 64512
    %v40 = vsel %vm38, %v29, 0
    %vm42 = vcmask 1043456
    %v44 = vsel %vm42, %v30, 0
    %46 = vmatprep.subr.bf16.mxu0 0
    %47 = vmatpush1.bf16.msra.mxu0 0
    %48 = vmatprep.subr.bf16.mxu0 0
    %49 = vmatpush1.bf16.msra.mxu0 0
    %50 = vmatprep.subr.bf16.mxu0 0
    %51 = vmatpush1.bf16.msra.mxu0 0
    %52 = vmatprep.subr.bf16.mxu0 0
    %53 = vmatpush1.bf16.msra.mxu0 0
    %54 = vmatprep.subr.bf16.mxu0 0
    %55 = vmatpush1.bf16.msra.mxu0 0
    %56 = vmatprep.subr.bf16.mxu0 0
    %57 = vmatpush1.bf16.msra.mxu0 0
    %58 = vmatprep.subr.bf16.mxu0 0
    %59 = vmatpush1.bf16.msra.mxu0 0
    %60 = vmatprep.subr.bf16.mxu0 0
    %61 = vmatpush1.bf16.msra.mxu0 %v44
    %62 = vmatprep.subr.bf16.mxu0 0
    %63 = vmatpush2.bf16.msra.mxu0 0
    %64 = vmatprep.subr.bf16.mxu0 0
    %65 = vmatpush2.bf16.msra.mxu0 0
    %66 = vmatprep.subr.bf16.mxu0 0
    %67 = vmatpush2.bf16.msra.mxu0 0
    %68 = vmatprep.subr.bf16.mxu0 0
    %69 = vmatpush2.bf16.msra.mxu0 0
    %70 = vmatprep.subr.bf16.mxu0 0
    %71 = vmatpush2.bf16.msra.mxu0 0
    %72 = vmatprep.subr.bf16.mxu0 0
    %73 = vmatpush2.bf16.msra.mxu0 0
    %74 = vmatprep.subr.bf16.mxu0 0
    %75 = vmatpush2.bf16.msra.mxu0 0
    %76 = vmatprep.subr.bf16.mxu0 0
    %77 = vmatpush2.bf16.msra.mxu0 0
    %78 = vmatprep.mubr.bf16.mxu0 0
    %79 = vmatmul.mubr.bf16.gmra.mxu0 %v40
    %v80 = vpop.f32.mrf.mxu0
    %v81 = vadd.f32 %v36, %v80
    %v82 = vpop.f32.mrf.mxu0
    %v83 = vpop.f32.mrf.mxu0
    %v84 = vpop.f32.mrf.mxu0
    %85 = vdwg.mxu0
    %v86 = vmax.f32 %v81, 0.0
    %v87 = vpack.c.bf16 %v86, %v86
    %v88 = vld [vmem:[%s3] sm:$0xf]
    %v89 = vld [vmem:[%s3 + $0x4] sm:$0xf]
    %v90 = vld [vmem:[%s3 + $0x8] sm:$0xf]
    %v91 = vld [vmem:[%s3 + $0xc] sm:$0xf]
    %v92 = vld [vmem:[%s3 + $0x10] sm:$0xf]
    %v93 = vld [vmem:[%s3 + $0x14] sm:$0xf]
    %v94 = vld [vmem:[%s3 + $0x18] sm:$0xf]
    %v95 = vld [vmem:[%s3 + $0x1c] sm:$0xf]
    %v96 = vld [vmem:[%s3 + $0x20] sm:$0xf]
    %v97 = vld [vmem:[%s3 + $0x24] sm:$0xf]
    %v98 = vld [vmem:[%s3 + $0x28] sm:$0xf]
    %v99 = vld [vmem:[%s3 + $0x2c] sm:$0xf]
    %v100 = vld [vmem:[%s3 + $0x30] sm:$0xf]
    %v101 = vld [vmem:[%s3 + $0x34] sm:$0xf]
    %v102 = vld [vmem:[%s3 + $0x38] sm:$0xf]
    %v103 = vld [vmem:[%s3 + $0x3c] sm:$0xf]
    %v104 = vld [vmem:[%s4] sm:$0x1]
    %v106 = vlaneseq
    %v107 = vshrl.u32 %v106, 7
    %v108 = vsub.s32 0, %v107
    %v109 = vrot.slane %v104, %v108
    %v127 = vunpack.c.l.b16 %v88
    %v128 = vunpack.c.l.b16 %v89
    %v129 = vunpack.c.l.b16 %v90
    %v130 = vunpack.c.l.b16 %v91
    %v131 = vunpack.c.l.b16 %v92
    %v132 = vunpack.c.l.b16 %v93
    %v133 = vunpack.c.l.b16 %v94
    %v134 = vunpack.c.l.b16 %v95
    %v135 = vunpack.c.l.b16 %v96
    %v136 = vunpack.c.l.b16 %v97
    %v137 = vunpack.c.l.b16 %v98
    %v138 = vunpack.c.l.b16 %v99
    %v139 = vunpack.c.l.b16 %v100
    %v140 = vunpack.c.l.b16 %v101
    %v141 = vunpack.c.l.b16 %v102
    %v142 = vunpack.c.l.b16 %v103
    %v143 = vpack.c.b16 %v128, %v127
    %v144 = vpack.c.b16 %v130, %v129
    %v145 = vpack.c.b16 %v132, %v131
    %v146 = vpack.c.b16 %v134, %v133
    %v147 = vpack.c.b16 %v136, %v135
    %v148 = vpack.c.b16 %v138, %v137
    %v149 = vpack.c.b16 %v140, %v139
    %v150 = vpack.c.b16 %v142, %v141
    %159 = vmatprep.subr.bf16.mxu0 0
    %160 = vmatpush1.bf16.msra.mxu0 %v150
    %161 = vmatprep.subr.bf16.mxu0 0
    %162 = vmatpush1.bf16.msra.mxu0 %v149
    %163 = vmatprep.subr.bf16.mxu0 0
    %164 = vmatpush1.bf16.msra.mxu0 %v148
    %165 = vmatprep.subr.bf16.mxu0 0
    %166 = vmatpush1.bf16.msra.mxu0 %v147
    %167 = vmatprep.subr.bf16.mxu0 0
    %168 = vmatpush1.bf16.msra.mxu0 %v146
    %169 = vmatprep.subr.bf16.mxu0 0
    %170 = vmatpush1.bf16.msra.mxu0 %v145
    %171 = vmatprep.subr.bf16.mxu0 0
    %172 = vmatpush1.bf16.msra.mxu0 %v144
    %173 = vmatprep.subr.bf16.mxu0 0
    %174 = vmatpush1.bf16.msra.mxu0 %v143
    %175 = vmatprep.subr.bf16.mxu0 0
    %176 = vmatpush2.bf16.msra.mxu0 0
    %177 = vmatprep.subr.bf16.mxu0 0
    %178 = vmatpush2.bf16.msra.mxu0 0
    %179 = vmatprep.subr.bf16.mxu0 0
    %180 = vmatpush2.bf16.msra.mxu0 0
    %181 = vmatprep.subr.bf16.mxu0 0
    %182 = vmatpush2.bf16.msra.mxu0 0
    %183 = vmatprep.subr.bf16.mxu0 0
    %184 = vmatpush2.bf16.msra.mxu0 0
    %185 = vmatprep.subr.bf16.mxu0 0
    %186 = vmatpush2.bf16.msra.mxu0 0
    %187 = vmatprep.subr.bf16.mxu0 0
    %188 = vmatpush2.bf16.msra.mxu0 0
    %189 = vmatprep.subr.bf16.mxu0 0
    %190 = vmatpush2.bf16.msra.mxu0 0
    %191 = vmatprep.mubr.bf16.mxu0 0
    %192 = vmatmul.mubr.bf16.gmra.mxu0 %v87
    %v193 = vpop.f32.mrf.mxu0
    %v194 = vadd.f32 %v109, %v193
    %v195 = vpop.f32.mrf.mxu0
    %v196 = vpop.f32.mrf.mxu0
    %v197 = vpop.f32.mrf.mxu0
    %198 = vdwg.mxu0
    %v199 = vmax.f32 %v194, 0.0
    %v200 = vpack.c.bf16 %v199, %v199
    %v201 = vld [vmem:[%s5] sm:$0xf]
    %v202 = vld [vmem:[%s5 + $0x4] sm:$0xf]
    %v203 = vld [vmem:[%s5 + $0x8] sm:$0xf]
    %v204 = vld [vmem:[%s5 + $0xc] sm:$0xf]
    %v205 = vld [vmem:[%s5 + $0x10] sm:$0xf]
    %v206 = vld [vmem:[%s5 + $0x14] sm:$0xf]
    %v207 = vld [vmem:[%s5 + $0x18] sm:$0xf]
    %v208 = vld [vmem:[%s5 + $0x1c] sm:$0xf]
    %v209 = vld [vmem:[%s5 + $0x20] sm:$0xf]
    %v210 = vld [vmem:[%s5 + $0x24] sm:$0xf]
    %v211 = vld [vmem:[%s5 + $0x28] sm:$0xf]
    %v212 = vld [vmem:[%s5 + $0x2c] sm:$0xf]
    %v213 = vld [vmem:[%s5 + $0x30] sm:$0xf]
    %v214 = vld [vmem:[%s5 + $0x34] sm:$0xf]
    %v215 = vld [vmem:[%s5 + $0x38] sm:$0xf]
    %v216 = vld [vmem:[%s5 + $0x3c] sm:$0xf]
    %v217 = vld [vmem:[%s6] sm:$0x1]
    %v219 = vlaneseq
    %v220 = vshrl.u32 %v219, 7
    %v221 = vsub.s32 0, %v220
    %v222 = vrot.slane %v217, %v221
    %v240 = vunpack.c.l.b16 %v201
    %v241 = vunpack.c.l.b16 %v202
    %v242 = vunpack.c.l.b16 %v203
    %v243 = vunpack.c.l.b16 %v204
    %v244 = vunpack.c.l.b16 %v205
    %v245 = vunpack.c.l.b16 %v206
    %v246 = vunpack.c.l.b16 %v207
    %v247 = vunpack.c.l.b16 %v208
    %v248 = vunpack.c.l.b16 %v209
    %v249 = vunpack.c.l.b16 %v210
    %v250 = vunpack.c.l.b16 %v211
    %v251 = vunpack.c.l.b16 %v212
    %v252 = vunpack.c.l.b16 %v213
    %v253 = vunpack.c.l.b16 %v214
    %v254 = vunpack.c.l.b16 %v215
    %v255 = vunpack.c.l.b16 %v216
    %v256 = vpack.c.b16 %v241, %v240
    %v257 = vpack.c.b16 %v243, %v242
    %v258 = vpack.c.b16 %v245, %v244
    %v259 = vpack.c.b16 %v247, %v246
    %v260 = vpack.c.b16 %v249, %v248
    %v261 = vpack.c.b16 %v251, %v250
    %v262 = vpack.c.b16 %v253, %v252
    %v263 = vpack.c.b16 %v255, %v254
    %272 = vmatprep.subr.bf16.mxu0 0
    %273 = vmatpush1.bf16.msra.mxu0 %v263
    %274 = vmatprep.subr.bf16.mxu0 0
    %275 = vmatpush1.bf16.msra.mxu0 %v262
    %276 = vmatprep.subr.bf16.mxu0 0
    %277 = vmatpush1.bf16.msra.mxu0 %v261
    %278 = vmatprep.subr.bf16.mxu0 0
    %279 = vmatpush1.bf16.msra.mxu0 %v260
    %280 = vmatprep.subr.bf16.mxu0 0
    %281 = vmatpush1.bf16.msra.mxu0 %v259
    %282 = vmatprep.subr.bf16.mxu0 0
    %283 = vmatpush1.bf16.msra.mxu0 %v258
    %284 = vmatprep.subr.bf16.mxu0 0
    %285 = vmatpush1.bf16.msra.mxu0 %v257
    %286 = vmatprep.subr.bf16.mxu0 0
    %287 = vmatpush1.bf16.msra.mxu0 %v256
    %288 = vmatprep.subr.bf16.mxu0 0
    %289 = vmatpush2.bf16.msra.mxu0 0
    %290 = vmatprep.subr.bf16.mxu0 0
    %291 = vmatpush2.bf16.msra.mxu0 0
    %292 = vmatprep.subr.bf16.mxu0 0
    %293 = vmatpush2.bf16.msra.mxu0 0
    %294 = vmatprep.subr.bf16.mxu0 0
    %295 = vmatpush2.bf16.msra.mxu0 0
    %296 = vmatprep.subr.bf16.mxu0 0
    %297 = vmatpush2.bf16.msra.mxu0 0
    %298 = vmatprep.subr.bf16.mxu0 0
    %299 = vmatpush2.bf16.msra.mxu0 0
    %300 = vmatprep.subr.bf16.mxu0 0
    %301 = vmatpush2.bf16.msra.mxu0 0
    %302 = vmatprep.subr.bf16.mxu0 0
    %303 = vmatpush2.bf16.msra.mxu0 0
    %304 = vmatprep.mubr.bf16.mxu0 0
    %305 = vmatmul.mubr.bf16.gmra.mxu0 %v200
    %v306 = vpop.f32.mrf.mxu0
    %v307 = vadd.f32 %v222, %v306
    %v308 = vpop.f32.mrf.mxu0
    %v309 = vpop.f32.mrf.mxu0
    %v310 = vpop.f32.mrf.mxu0
    %311 = vdwg.mxu0
    %v312 = vtanh.pop %v307
    %vm313 = vcmask 25600
    %314 = vst.msk [vmem:[#allocation2] sm:$0x3] %vm313, %v312
    // Predicated region
    $region30: #{dqn_forward.1} parent=1 // pred_check
      _
    $region31: #{dqn_forward.1} parent=1 // pred_check_branch
      %316 = sbr.rel (0) target = $region33
    $region32: #{dqn_forward.1} parent=1 // pred_region
      %s318 = ssub.s32 32, 32
      %319 = vsyncadd [#allocation3], %s318
      %s321 = sshll.u32 [#allocation2], 4
      %s322 = int_to_ptr.vmem [resolvable:$true] %s321
      %324 = dma.vmem_to_hbm [thread:$0]  %s322, 32, %s7, [#allocation3]
    $region33: #{dqn_forward.1} parent=1 // pred_fallthru
      _
    // Predicated region
    $region34: #{dqn_forward.1} parent=1 // pred_check
      _
    $region35: #{dqn_forward.1} parent=1 // pred_check_branch
      %326 = sbr.rel (0) target = $region37
    $region36: #{dqn_forward.1} parent=1 // pred_region
      %327 = dma.done [#allocation3], 32
    $region37: #{dqn_forward.1} parent=1 // pred_fallthru
      _
    %328 = vsyncpa [#allocation3], 1

</llo_original>
